<compile_context>
chip_gen: v6e
topology: v6e:2x2x1
jax: 0.10.0
libtpu: 0.0.40
codegen_flags: <defaults>
</compile_context>

<pallas_src>
import jax
import jax.numpy as jnp
from jax.experimental import pallas as pl
from jax.experimental.pallas import tpu as pltpu


def _pair_avg_kernel(f0_ref, f1_ref, o_ref):
    # f0_ref / f1_ref: (BM, HW_CHUNK) lane-dense views of the two frames of each pair.
    s = f0_ref[...].astype(jnp.float32) + f1_ref[...].astype(jnp.float32)
    o_ref[...] = (s * 0.5).astype(o_ref.dtype)


def _pair_avg_split_kernel(x_ref, o_ref):
    # Fallback for HW % 128 != 0: x_ref is (BM, 2*HW), halves split in-kernel.
    hw = o_ref.shape[-1]
    s = x_ref[:, :hw].astype(jnp.float32) + x_ref[:, hw:].astype(jnp.float32)
    o_ref[...] = (s * 0.5).astype(o_ref.dtype)


def _default_block_budget():
    """Per-step input-block byte budget, tuned per TPU generation."""
    try:
        info = pltpu.get_tpu_info()
        vmem = getattr(info, "vmem_capacity_bytes", None)
    except Exception:  # query can fail off-TPU / on old runtimes -> safe default
        vmem = None
    if vmem is not None and vmem <= 96 * 1024 * 1024:
        # v7x-class (64 MiB VMEM/TC, >3 TB/s HBM): larger blocks amortize the
        # ~0.35 us/step grid + DMA-setup overhead.
        return 8 * 1024 * 1024
    # v5e / v6e (128 MiB VMEM) or unknown: ~4 MiB already sits near the roofline plateau.
    return 4 * 1024 * 1024


def temporal_pool(x, *, target_block_bytes=None):
    """AvgPool3d(kernel_size=(2,1,1), stride=(2,1,1)) on NCDHW input (ceil_mode=False)."""
    N, C, T, H, W = x.shape
    T_out = T // 2  # PyTorch floor-divides; trailing odd frame is dropped.
    HW = H * W
    M = N * C * T_out

    if T_out == 0 or M == 0 or HW == 0:
        return jnp.zeros((N, C, T_out, H, W), dtype=x.dtype)

    dsize = jnp.dtype(x.dtype).itemsize
    sublane = {4: 8, 2: 16, 1: 32}.get(dsize, 8)  # native sublane tile per dtype

    if target_block_bytes is None:
        target_block_bytes = _default_block_budget()
    # Never go below one minimal (sublane x 2*128) pair tile.
    target_block_bytes = max(int(target_block_bytes), 2 * sublane * 128 * dsize)

    # Drop a trailing odd frame (matches PyTorch). For even T (the common case) the reshape
    # below is a zero-copy view; for odd T the slice costs one extra HBM pass.
    x2 = x[:, :, : 2 * T_out] if (T % 2) else x
    xf = x2.reshape(M, 2 * HW)

    lane_aligned = (HW % 128) == 0

    if lane_aligned:
        # Column chunk: largest multiple-of-128 divisor of HW such that a
        # (sublane x 2*hw_chunk) input block still fits the budget.
        max_col_tiles = max(1, target_block_bytes // (2 * sublane * dsize * 128))
        q = HW // 128
        d = 1
        for cand in range(min(q, max_col_tiles), 0, -1):
            if q % cand == 0:
                d = cand
                break
        hw_chunk = 128 * d
        n_col = HW // hw_chunk
    else:
        hw_chunk = HW
        n_col = 1

    # Rows per block: fill the budget, rounded to the dtype's sublane tile.
    row_bytes = 2 * hw_chunk * dsize
    rows = max(1, target_block_bytes // row_bytes)
    bm = min(M, max(sublane, (rows // sublane) * sublane))
    n_row = -(-M // bm)

    # Megacore: never collapse to a single grid block when the rows can be split --
    # a (1,)/(1,1) grid serializes on one TensorCore and idles half the chip's HBM paths.
    if n_row * n_col < 2 and M >= 2 * sublane:
        bm = max(sublane, (((M + 1) // 2) // sublane) * sublane)
        n_row = -(-M // bm)

    # Raise the scoped-VMEM limit to cover double-buffered blocks with headroom.
    step_bytes = (2 * bm * hw_chunk + bm * hw_chunk) * dsize  # input + output per step
    vmem_limit = min(max(3 * step_bytes, 32 * 1024 * 1024), 48 * 1024 * 1024)

    cost = pl.CostEstimate(
        flops=2 * M * HW,                   # one add + one mul per output element
        transcendentals=0,
        bytes_accessed=3 * M * HW * dsize,  # read 2x, write 1x
    )

    if lane_aligned:
        out_flat = pl.pallas_call(
            _pair_avg_kernel,
            out_shape=jax.ShapeDtypeStruct((M, HW), x.dtype),
            grid_spec=pltpu.PrefetchScalarGridSpec(
                num_scalar_prefetch=0,
                grid=(n_row, n_col),
                in_specs=[
                    # Frame-0 columns of each pair-row.
                    pl.BlockSpec((bm, hw_chunk), lambda i, k: (i, k)),
                    # Frame-1 columns: same array, column block shifted by HW.
                    pl.BlockSpec((bm, hw_chunk), lambda i, k: (i, k + n_col)),
                ],
                out_specs=pl.BlockSpec((bm, hw_chunk), lambda i, k: (i, k)),
            ),
            compiler_params=pltpu.CompilerParams(
                dimension_semantics=("parallel", "parallel"),
                vmem_limit_bytes=vmem_limit,
            ),
            cost_estimate=cost,
        )(xf, xf)
    else:
        out_flat = pl.pallas_call(
            _pair_avg_split_kernel,
            out_shape=jax.ShapeDtypeStruct((M, HW), x.dtype),
            grid_spec=pltpu.PrefetchScalarGridSpec(
                num_scalar_prefetch=0,
                grid=(n_row,),
                in_specs=[pl.BlockSpec((bm, 2 * HW), lambda i: (i, 0))],
                out_specs=pl.BlockSpec((bm, HW), lambda i: (i, 0)),
            ),
            compiler_params=pltpu.CompilerParams(
                dimension_semantics=("parallel",),
                vmem_limit_bytes=vmem_limit,
            ),
            cost_estimate=cost,
        )(xf)

    return out_flat.reshape(N, C, T_out, H, W)


def _ref_pool(x):
    """Plain-JAX reference: average of temporal frame pairs (f32 accumulate)."""
    N, C, T, H, W = x.shape
    T_out = T // 2
    xe = x[:, :, : 2 * T_out].astype(jnp.float32)
    out = 0.5 * (xe[:, :, 0::2] + xe[:, :, 1::2])
    return out.astype(x.dtype)


if __name__ == "__main__":
    key = jax.random.PRNGKey(0)

    tests = [
        ((2, 4, 8, 16, 16), jnp.float32),   # even T, HW % 128 == 0: fast path, 2 row blocks
        ((1, 2, 5, 16, 8),  jnp.float32),   # odd T: trailing frame dropped
        ((2, 2, 4, 7, 7),   jnp.float32),   # HW % 128 != 0: fallback split path
        ((2, 2, 6, 8, 16),  jnp.bfloat16),  # packed dtype, f32 accumulation
    ]
    for idx, (shape, dtype) in enumerate(tests):
        key, sub = jax.random.split(key)
        x = jax.random.normal(sub, shape, dtype=jnp.float32).astype(dtype)
        out = jax.block_until_ready(temporal_pool(x))
        ref = _ref_pool(x)
        assert out.shape == ref.shape, (idx, out.shape, ref.shape)
        tol = 1e-6 if dtype == jnp.float32 else 1e-2
        assert jnp.allclose(out.astype(jnp.float32), ref.astype(jnp.float32),
                            atol=tol, rtol=tol), f"mismatch vs reference in test {idx}"

    print("KERNEL_OK")
</pallas_src>

<mosaic_0001>
module attributes {stable_mosaic.version = 11 : i64} {
  func.func @_pair_avg_kernel(%arg0: i32, %arg1: i32, %arg2: memref<16x256xf32, #tpu.memory_space<vmem>>, %arg3: memref<16x256xf32, #tpu.memory_space<vmem>>, %arg4: memref<16x256xf32, #tpu.memory_space<vmem>>) attributes {dimension_semantics = [#tpu.dimension_semantics<parallel>, #tpu.dimension_semantics<parallel>], iteration_bounds = array<i64: 2, 1>, scalar_prefetch = 0 : i64, scratch_operands = 0 : i64, tpu.core_type = #tpu.core_type<tc>, window_params = [{transform_indices = @transform_0, window_bounds = array<i64: 16, 256>}, {transform_indices = @transform_1, window_bounds = array<i64: 16, 256>}, {transform_indices = @transform_2, window_bounds = array<i64: 16, 256>}]} {
    %c0 = arith.constant 0 : index
    %c0_0 = arith.constant 0 : index
    %0 = vector.load %arg2[%c0, %c0_0] : memref<16x256xf32, #tpu.memory_space<vmem>>, vector<16x256xf32>
    %c0_1 = arith.constant 0 : index
    %c0_2 = arith.constant 0 : index
    %1 = vector.load %arg3[%c0_1, %c0_2] : memref<16x256xf32, #tpu.memory_space<vmem>>, vector<16x256xf32>
    %2 = arith.addf %0, %1 : vector<16x256xf32>
    %cst = arith.constant 5.000000e-01 : f32
    %3 = vector.broadcast %cst : f32 to vector<16x256xf32>
    %4 = arith.mulf %2, %3 : vector<16x256xf32>
    %c0_3 = arith.constant 0 : index
    %c0_4 = arith.constant 0 : index
    %5 = vector.load %arg4[%c0_3, %c0_4] : memref<16x256xf32, #tpu.memory_space<vmem>>, vector<16x256xf32>
    tpu.vector_store %arg4[%c0_3, %c0_4], %4 {strides = array<i32>} : memref<16x256xf32, #tpu.memory_space<vmem>>, vector<16x256xf32>,
    return
  }
  func.func @transform_0(%arg0: i32, %arg1: i32) -> (i32, i32) {
    %c0_i32 = arith.constant 0 : i32
    return %arg0, %arg1 : i32, i32
  }
  func.func @transform_1(%arg0: i32, %arg1: i32) -> (i32, i32) {
    %c1_i32 = arith.constant 1 : i32
    %0 = arith.addi %arg1, %c1_i32 : i32
    %c0_i32 = arith.constant 0 : i32
    return %arg0, %0 : i32, i32
  }
  func.func @transform_2(%arg0: i32, %arg1: i32) -> (i32, i32) {
    %c0_i32 = arith.constant 0 : i32
    return %arg0, %arg1 : i32, i32
  }
}

</mosaic_0001>

<llo_original>
// kernel: tpu_custom_call.1
$region0: #{tpu_custom_call.1}
  #allocation0 [shape = 'u32[]', space=smem, size = 0x4, offset = 0x4, fixed_abs, tag = 'smem constant byte address 0x4 - core index']
  #allocation1 [shape = 'u32[144,128]{1,0:T(1,128)}', space=vmem, size = 0x12000, scoped, tag = 'internal scratch']
  %s0 = inlined_call_operand.hbm [shape: f32[32,512], index: 0, kind: input, shape index: {}]
  %s1 = inlined_call_operand.hbm [shape: f32[32,512], index: 1, kind: input, shape index: {}]
  %s2 = inlined_call_operand.hbm [shape: f32[32,256], index: 2, kind: output, shape index: {}]
  %s3 = sld [smem:[#allocation0]]
  $region49: #{tpu_custom_call.1} parent=0
    _
  %s5 = ssub.s32 1, %s3
  %s6 = scalar_select 0, %s5, %s3
  $region1: #{tpu_custom_call.1} parent=0
    #allocation2 [shape = 'u8[32768]{0}', space=vmem, size = 0x8000, scoped, tag = 'input window, operand 0']
    #allocation3 [shape = 's32[2]{0}', space=sflag, size = 0x8, scoped, tag = 'scoped memory for tpu_custom_call.1']
    #allocation4 [shape = 's32[2]{0}', space=sflag, size = 0x8, scoped, tag = 'scoped memory for tpu_custom_call.1']
    #allocation5 [shape = 'u8[32768]{0}', space=vmem, size = 0x8000, scoped, tag = 'input window, operand 1']
    #allocation6 [shape = 's32[2]{0}', space=sflag, size = 0x8, scoped, tag = 'scoped memory for tpu_custom_call.1']
    #allocation7 [shape = 'u8[32768]{0}', space=vmem, size = 0x8000, scoped, tag = 'output window, operand 0']
    %7 = vsyncpa [#allocation3], 0
    %s8 = scalar_lea.sflag [#allocation3], 1
    %9 = vsyncpa %s8, 0
    %10 = vsyncpa [#allocation6], 0
    %s11 = scalar_lea.sflag [#allocation6], 1
    %12 = vsyncpa %s11, 0
    %13 = vsyncpa [#allocation4], 0
    %s14 = scalar_lea.sflag [#allocation4], 1
    %15 = vsyncpa %s14, 0
    loop: start=0, step=1, limit=4
    $region2: #{tpu_custom_call.1} parent=1 // loop_pre_header
      _
    $region3: #{tpu_custom_call.1} parent=1 // loop_header
      %s17 = sphi 0, %s21
      %p18 = scmp.ge.s32.totalorder %s17, 4
      %s24 = sphi 0, %s36
      %s25 = sphi 0, %s32
      %s26 = sphi 0, %s24
      %s27 = sphi 0, %s25
      %s28 = sphi 0, %s26
      %s29 = sphi 0, %s27
      %s41 = sphi 0, %s43
      %s44 = sphi 0, %s41
      %s45 = sphi 0, %s44
      %s61 = sphi 0, %s45
      %s71 = sphi 0, %s73
      %s74 = sphi 0, %s71
      %s75 = sphi 0, %s74
      %s91 = sphi 0, %s75
      %s99 = sphi 0, %s101
      %s102 = sphi 0, %s99
      %s103 = sphi 0, %s102
      %s119 = sphi 0, %s103
    $region4: #{tpu_custom_call.1} parent=1 // loop_header_branch
      %20 = sbr.rel (%p18) target = $region8
    $region5: #{tpu_custom_call.1} parent=1 // loop_body
      %s22 = ssub.s32 %s17, 1
      %s23 = ssub.s32 %s17, 2
      %s30 = sadd.s32 1, %s25
      %p31 = scmp.ge.s32.totalorder %s30, 1
      %s32 = scalar_select %p31, 0, %s30
      %s33 = sadd.s32 1, %s24
      %s34 = scalar_select %p31, %s33, %s24
      %p35 = scmp.ge.s32.totalorder %s34, 2
      %s36 = scalar_select %p35, 0, %s34
      %s37 = ssub.s32 %s24, %s36
      %s38 = ssub.s32 %s25, %s32
      %s39 = sor.u32 %s37, %s38
      %p40 = scmp.eq.s32.totalorder %s39, 0
      %s42 = sadd.s32 %s41, 1
      %s43 = scalar_select %p40, %s41, %s42
      %p46 = pneg %p40
      %p47 = scmp.eq.s32.totalorder %s17, 1
      %p48 = por %p46, %p47
      %p49 = scmp.ne.s32.totalorder %s41, %s44
      %p50 = scmp.eq.s32.totalorder %s17, 0
      %p51 = por %p49, %p50
      %p52 = scmp.ne.s32.totalorder %s41, %s44
      %p53 = scmp.eq.s32.totalorder %s22, 1
      %p54 = por %p52, %p53
      %p55 = scmp.ne.s32.totalorder %s44, %s45
      %p56 = scmp.eq.s32.totalorder %s22, 0
      %p57 = por %p55, %p56
      %p58 = scmp.ne.s32.totalorder %s44, %s45
      %p59 = scmp.eq.s32.totalorder %s23, 1
      %p60 = por %p58, %p59
      %p62 = scmp.ne.s32.totalorder %s45, %s61
      %p63 = scmp.eq.s32.totalorder %s23, 0
      %p64 = por %p62, %p63
      %s65 = sadd.s32 %s25, 1
      %s66 = sadd.s32 %s32, 1
      %s67 = ssub.s32 %s24, %s36
      %s68 = ssub.s32 %s65, %s66
      %s69 = sor.u32 %s67, %s68
      %p70 = scmp.eq.s32.totalorder %s69, 0
      %s72 = sadd.s32 %s71, 1
      %s73 = scalar_select %p70, %s71, %s72
      %p76 = pneg %p70
      %p77 = scmp.eq.s32.totalorder %s17, 1
      %p78 = por %p76, %p77
      %p79 = scmp.ne.s32.totalorder %s71, %s74
      %p80 = scmp.eq.s32.totalorder %s17, 0
      %p81 = por %p79, %p80
      %p82 = scmp.ne.s32.totalorder %s71, %s74
      %p83 = scmp.eq.s32.totalorder %s22, 1
      %p84 = por %p82, %p83
      %p85 = scmp.ne.s32.totalorder %s74, %s75
      %p86 = scmp.eq.s32.totalorder %s22, 0
      %p87 = por %p85, %p86
      %p88 = scmp.ne.s32.totalorder %s74, %s75
      %p89 = scmp.eq.s32.totalorder %s23, 1
      %p90 = por %p88, %p89
      %p92 = scmp.ne.s32.totalorder %s75, %s91
      %p93 = scmp.eq.s32.totalorder %s23, 0
      %p94 = por %p92, %p93
      %s95 = ssub.s32 %s24, %s36
      %s96 = ssub.s32 %s25, %s32
      %s97 = sor.u32 %s95, %s96
      %p98 = scmp.eq.s32.totalorder %s97, 0
      %s100 = sadd.s32 %s99, 1
      %s101 = scalar_select %p98, %s99, %s100
      %p104 = pneg %p98
      %p105 = scmp.eq.s32.totalorder %s17, 1
      %p106 = por %p104, %p105
      %p107 = scmp.ne.s32.totalorder %s99, %s102
      %p108 = scmp.eq.s32.totalorder %s17, 0
      %p109 = por %p107, %p108
      %p110 = scmp.ne.s32.totalorder %s99, %s102
      %p111 = scmp.eq.s32.totalorder %s22, 1
      %p112 = por %p110, %p111
      %p113 = scmp.ne.s32.totalorder %s102, %s103
      %p114 = scmp.eq.s32.totalorder %s22, 0
      %p115 = por %p113, %p114
      %p116 = scmp.ne.s32.totalorder %s102, %s103
      %p117 = scmp.eq.s32.totalorder %s23, 1
      %p118 = por %p116, %p117
      %p120 = scmp.ne.s32.totalorder %s103, %s119
      %p121 = scmp.eq.s32.totalorder %s23, 0
      %p122 = por %p120, %p121
      %p123 = scmp.le.s32.totalorder 1, %s17
      %p124 = scmp.lt.s32.totalorder %s17, 3
      %p125 = pnand %p123, %p124
      %p126 = pneg %p125
      // Predicated region
      $region9: #{tpu_custom_call.1} parent=5 // pred_check
        _
      $region10: #{tpu_custom_call.1} parent=5 // pred_check_branch
        %128 = sbr.rel (%p125) target = $region12
      $region11: #{tpu_custom_call.1} parent=5 // pred_region
        %s129 = ssub.s32 %s17, 1
      $region12: #{tpu_custom_call.1} parent=5 // pred_fallthru
        _
      %p130 = scmp.lt.s32.totalorder %s17, 2
      // Predicated region
      $region13: #{tpu_custom_call.1} parent=5 // pred_check
        %p131 = pneg %p130
      $region14: #{tpu_custom_call.1} parent=5 // pred_check_branch
        %133 = sbr.rel (%p131) target = $region16
      $region15: #{tpu_custom_call.1} parent=5 // pred_region
        // Predicated region
        $region17: #{tpu_custom_call.1} parent=15 // pred_check
          %p134 = pneg %p51
        $region18: #{tpu_custom_call.1} parent=15 // pred_check_branch
          %136 = sbr.rel (%p134) target = $region20
        $region19: #{tpu_custom_call.1} parent=15 // pred_region
          %s137 = sand.u32 %s41, 1
          %s138 = scalar_lea.sflag [#allocation3], %s137
          %s139 = sand.u32 %s41, 1
          %s140 = smul.addr %s139, 32
          %s141 = scalar_lea.vmem [#allocation2], %s140
          %s142 = smul.u32 2, %s24
          %s143 = smul.u32 2, %s25
          %s145 = ssub.s32 512, 512
          %146 = vsyncadd %s138, %s145
          %s147 = smul.addr %s142, 4
          %s148 = sadd.s32 %s143, %s147
          %s149 = smul.addr %s148, 128
          %s150 = scalar_lea.hbm %s0, %s149
          %s151 = sshll.u32 %s141, 4
          %s152 = int_to_ptr.vmem [resolvable:$true] %s151
          %157 = dma.hbm_to_vmem [thread:$0]  %s150, 512, %s152, %s138, 512, 256, 16
        $region20: #{tpu_custom_call.1} parent=15 // pred_fallthru
          _
        // Predicated region
        $region21: #{tpu_custom_call.1} parent=15 // pred_check
          %p158 = pneg %p81
        $region22: #{tpu_custom_call.1} parent=15 // pred_check_branch
          %160 = sbr.rel (%p158) target = $region24
        $region23: #{tpu_custom_call.1} parent=15 // pred_region
          %s161 = sand.u32 %s71, 1
          %s162 = scalar_lea.sflag [#allocation6], %s161
          %s163 = sand.u32 %s71, 1
          %s164 = smul.addr %s163, 32
          %s165 = scalar_lea.vmem [#allocation5], %s164
          %s166 = sadd.s32 %s25, 1
          %s167 = smul.u32 2, %s24
          %s168 = smul.u32 2, %s166
          %s170 = ssub.s32 512, 512
          %171 = vsyncadd %s162, %s170
          %s172 = smul.addr %s167, 4
          %s173 = sadd.s32 %s168, %s172
          %s174 = smul.addr %s173, 128
          %s175 = scalar_lea.hbm %s1, %s174
          %s176 = sshll.u32 %s165, 4
          %s177 = int_to_ptr.vmem [resolvable:$true] %s176
          %182 = dma.hbm_to_vmem [thread:$0]  %s175, 512, %s177, %s162, 512, 256, 16
        $region24: #{tpu_custom_call.1} parent=15 // pred_fallthru
          _
      $region16: #{tpu_custom_call.1} parent=5 // pred_fallthru
        _
      %p183 = scmp.le.s32.totalorder 1, %s17
      %p184 = scmp.lt.s32.totalorder %s17, 3
      %p185 = pnand %p183, %p184
      %p186 = pneg %p185
      // Predicated region
      $region25: #{tpu_custom_call.1} parent=5 // pred_check
        _
      $region26: #{tpu_custom_call.1} parent=5 // pred_check_branch
        %188 = sbr.rel (%p185) target = $region28
      $region27: #{tpu_custom_call.1} parent=5 // pred_region
        %s189 = ssub.s32 %s17, 1
        %s190 = sand.u32 %s44, 1
        %s191 = scalar_lea.sflag [#allocation3], %s190
        %s192 = sand.u32 %s44, 1
        %s193 = smul.addr %s192, 32
        %s194 = scalar_lea.vmem [#allocation2], %s193
        // Predicated region
        $region29: #{tpu_custom_call.1} parent=27 // pred_check
          %p195 = pneg %p57
        $region30: #{tpu_custom_call.1} parent=27 // pred_check_branch
          %197 = sbr.rel (%p195) target = $region32
        $region31: #{tpu_custom_call.1} parent=27 // pred_region
          %198 = dma.done %s191, 512
        $region32: #{tpu_custom_call.1} parent=27 // pred_fallthru
          _
        %s199 = sand.u32 %s74, 1
        %s200 = scalar_lea.sflag [#allocation6], %s199
        %s201 = sand.u32 %s74, 1
        %s202 = smul.addr %s201, 32
        %s203 = scalar_lea.vmem [#allocation5], %s202
        // Predicated region
        $region33: #{tpu_custom_call.1} parent=27 // pred_check
          %p204 = pneg %p87
        $region34: #{tpu_custom_call.1} parent=27 // pred_check_branch
          %206 = sbr.rel (%p204) target = $region36
        $region35: #{tpu_custom_call.1} parent=27 // pred_region
          %207 = dma.done %s200, 512
        $region36: #{tpu_custom_call.1} parent=27 // pred_fallthru
          _
        %s208 = sand.u32 %s44, 1
        %s209 = scalar_lea.sflag [#allocation3], %s208
        %s210 = sand.u32 %s44, 1
        %s211 = smul.addr %s210, 32
        %s212 = scalar_lea.vmem [#allocation2], %s211
        %p213 = pneg %p57
        %p214 = pneg %p54
        %s215 = sand.u32 %s74, 1
        %s216 = scalar_lea.sflag [#allocation6], %s215
        %s217 = sand.u32 %s74, 1
        %s218 = smul.addr %s217, 32
        %s219 = scalar_lea.vmem [#allocation5], %s218
        %p220 = pneg %p87
        %p221 = pneg %p84
        %p222 = pneg %p115
        %p223 = pneg %p112
        %s224 = sand.u32 %s102, 1
        %s225 = scalar_lea.sflag [#allocation4], %s224
        %s226 = sand.u32 %s102, 1
        %s227 = smul.addr %s226, 32
        %s228 = scalar_lea.vmem [#allocation7], %s227
        %s229 = smul.u32 2, %s26
        %s230 = smul.u32 2, %s27
        %s231 = sadd.s32 %s27, 1
        %s232 = smul.u32 2, %s26
        %s233 = smul.u32 2, %s231
        %s234 = smul.u32 2, %s26
        %s235 = smul.u32 2, %s27
        %v236 = vld [vmem:[%s194] sm:$0xff]
        %v237 = vld [vmem:[%s194 + $0x8] sm:$0xff]
        %v238 = vld [vmem:[%s194 + $0x10] sm:$0xff]
        %v239 = vld [vmem:[%s194 + $0x18] sm:$0xff]
        %v240 = vld [vmem:[%s203] sm:$0xff]
        %v241 = vld [vmem:[%s203 + $0x8] sm:$0xff]
        %v242 = vld [vmem:[%s203 + $0x10] sm:$0xff]
        %v243 = vld [vmem:[%s203 + $0x18] sm:$0xff]
        %v244 = vadd.f32 %v236, %v240
        %v245 = vadd.f32 %v237, %v241
        %v246 = vadd.f32 %v238, %v242
        %v247 = vadd.f32 %v239, %v243
        %v248 = vmul.f32 %v244, 0.5
        %v249 = vmul.f32 %v245, 0.5
        %v250 = vmul.f32 %v246, 0.5
        %v251 = vmul.f32 %v247, 0.5
        %252 = vst [vmem:[%s228] sm:$0xff] %v248
        %253 = vst [vmem:[%s228 + $0x8] sm:$0xff] %v249
        %254 = vst [vmem:[%s228 + $0x10] sm:$0xff] %v250
        %255 = vst [vmem:[%s228 + $0x18] sm:$0xff] %v251
        %s256 = sand.u32 %s102, 1
        %s257 = scalar_lea.sflag [#allocation4], %s256
        %s258 = sand.u32 %s102, 1
        %s259 = smul.addr %s258, 32
        %s260 = scalar_lea.vmem [#allocation7], %s259
        // Predicated region
        $region37: #{tpu_custom_call.1} parent=27 // pred_check
          %p261 = pneg %p112
        $region38: #{tpu_custom_call.1} parent=27 // pred_check_branch
          %263 = sbr.rel (%p261) target = $region40
        $region39: #{tpu_custom_call.1} parent=27 // pred_region
          %s264 = smul.u32 2, %s26
          %s265 = smul.u32 2, %s27
          %s267 = ssub.s32 512, 512
          %268 = vsyncadd %s257, %s267
          %s269 = smul.addr %s264, 2
          %s270 = sadd.s32 %s265, %s269
          %s271 = smul.addr %s270, 128
          %s272 = scalar_lea.hbm %s2, %s271
          %s273 = sshll.u32 %s260, 4
          %s274 = int_to_ptr.vmem [resolvable:$true] %s273
          %279 = dma.vmem_to_hbm [thread:$0]  %s274, 512, %s272, %s257, 256, 256, 16
        $region40: #{tpu_custom_call.1} parent=27 // pred_fallthru
          _
      $region28: #{tpu_custom_call.1} parent=5 // pred_fallthru
        _
      %p280 = scmp.le.s32.totalorder 2, %s17
      // Predicated region
      $region41: #{tpu_custom_call.1} parent=5 // pred_check
        %p281 = pneg %p280
      $region42: #{tpu_custom_call.1} parent=5 // pred_check_branch
        %283 = sbr.rel (%p281) target = $region44
      $region43: #{tpu_custom_call.1} parent=5 // pred_region
        %s284 = ssub.s32 %s17, 2
        // Predicated region
        $region45: #{tpu_custom_call.1} parent=43 // pred_check
          %p285 = pneg %p118
        $region46: #{tpu_custom_call.1} parent=43 // pred_check_branch
          %287 = sbr.rel (%p285) target = $region48
        $region47: #{tpu_custom_call.1} parent=43 // pred_region
          %s288 = sand.u32 %s103, 1
          %s289 = scalar_lea.sflag [#allocation4], %s288
          %s290 = sand.u32 %s103, 1
          %s291 = smul.addr %s290, 32
          %s292 = scalar_lea.vmem [#allocation7], %s291
          %293 = dma.done %s289, 512
        $region48: #{tpu_custom_call.1} parent=43 // pred_fallthru
          _
      $region44: #{tpu_custom_call.1} parent=5 // pred_fallthru
        _
    $region6: #{tpu_custom_call.1} parent=1 // loop_footer
      %s21 = sadd.s32 1, %s17
    $region7: #{tpu_custom_call.1} parent=1 // loop_footer_branch
      %16 = sbr.rel target = $region3
    $region8: #{tpu_custom_call.1} parent=1 // loop_exit
      _
    %294 = vsyncpa [#allocation3], 1
    %s295 = scalar_lea.sflag [#allocation3], 1
    %296 = vsyncpa %s295, 1
    %297 = vsyncpa [#allocation6], 1
    %s298 = scalar_lea.sflag [#allocation6], 1
    %299 = vsyncpa %s298, 1
    %300 = vsyncpa [#allocation4], 1
    %s301 = scalar_lea.sflag [#allocation4], 1
    %302 = vsyncpa %s301, 1

</llo_original>
